<compile_context>
chip_gen: v5e
topology: v5e:2x2
jax: 0.10.0
libtpu: 0.0.40
codegen_flags: <defaults>
</compile_context>

<pallas_src>
import jax
import jax.numpy as jnp
from jax import lax
from jax.experimental import pallas as pl
from jax.experimental.pallas import tpu as pltpu


def valuenet_kernel(x_ref, w1_ref, b1_ref, w2_ref, b2_ref, o_ref):
    # fc1: h = relu(x @ W1^T + b1)  ->  (block_batch, hidden)
    # Contract x's state_dim (lanes) against W1's state_dim (lanes) on the MXU.
    h = lax.dot_general(
        x_ref[...], w1_ref[...],
        dimension_numbers=(((1,), (1,)), ((), ())),
        preferred_element_type=jnp.float32,
    )
    h = jnp.maximum(h + b1_ref[...], 0.0)          # b1 is (1, hidden) -> bcast over batch

    # fc2 (out_features == 1): VPU multiply + cross-lane reduce (XLU) instead of
    # a 1-column MXU matmul.
    v = jnp.sum(h * w2_ref[...], axis=1, keepdims=True)   # (block_batch, 1)
    o_ref[...] = (v + b2_ref[0]).astype(o_ref.dtype)


def value_net_forward(x, w1, b1, w2, b2, *, block_batch=None):
    """x: [B, state_dim]; w1: [hidden, state_dim] (PyTorch [out, in]);
    b1: [hidden]; w2: [1, hidden] or [hidden, 1]; b2: [1].  Returns [B, 1]."""
    B, state_dim = x.shape
    hidden = w1.shape[0]

    # Per perf review: one big step (grid=1) unless the batch is very large.
    if block_batch is None:
        block_batch = B if B <= 4096 else 4096
    block_batch = min(block_batch, B)
    assert B % block_batch == 0, "ragged batches unsupported"
    if block_batch != B:
        assert block_batch % 8 == 0, "block_batch must be a multiple of 8 (sublanes)"

    b1_row = b1.reshape(1, hidden)     # broadcast over batch (sublanes)
    w2_row = w2.reshape(1, hidden)     # fc2 weights as a lane row
    b2_1d = b2.reshape(1)              # scalar -> SMEM

    grid = (B // block_batch,)

    out = pl.pallas_call(
        valuenet_kernel,
        out_shape=jax.ShapeDtypeStruct((B, 1), x.dtype),
        grid=grid,
        in_specs=[
            # x tile in natural layout: batch on sublanes, state_dim on lanes.
            pl.BlockSpec((block_batch, state_dim), lambda i: (i, 0)),
            # Resident weights / biases (constant index_map -> stay in VMEM).
            pl.BlockSpec((hidden, state_dim), lambda i: (0, 0)),
            pl.BlockSpec((1, hidden), lambda i: (0, 0)),
            pl.BlockSpec((1, hidden), lambda i: (0, 0)),
            # Scalar fc2 bias in SMEM (avoids padding a (1,1) VMEM tile).
            pl.BlockSpec(memory_space=pltpu.MemorySpace.SMEM),
        ],
        out_specs=pl.BlockSpec((block_batch, 1), lambda i: (i, 0)),
        compiler_params=pltpu.CompilerParams(
            # Per-step work is far too small to benefit from cross-TC sharding.
            dimension_semantics=("arbitrary",),
        ),
    )(x, w1, b1_row, w2_row, b2_1d)

    return out


def reference_forward(x, w1, b1, w2, b2):
    h = jnp.maximum(x @ w1.T + b1, 0.0)
    return h @ w2.reshape(1, -1).T + b2


if __name__ == "__main__":
    # Shapes implied by the module: state_dim -> hidden_dim -> 1.
    batch, state_dim, hidden_dim = 512, 4, 32

    key = jax.random.PRNGKey(0)
    kx, kw1, kb1, kw2, kb2 = jax.random.split(key, 5)

    x = jax.random.normal(kx, (batch, state_dim), dtype=jnp.float32)

    # Deterministic synthetic parameters (PyTorch Linear layout: [out, in]).
    w1 = jax.random.normal(kw1, (hidden_dim, state_dim), dtype=jnp.float32) * 0.1
    b1 = jax.random.normal(kb1, (hidden_dim,), dtype=jnp.float32) * 0.1
    w2 = jax.random.normal(kw2, (1, hidden_dim), dtype=jnp.float32) * 0.1
    b2 = jax.random.normal(kb2, (1,), dtype=jnp.float32) * 0.1

    out = value_net_forward(x, w1, b1, w2, b2)   # grid = 1: full batch per step
    out = jax.block_until_ready(out)

    ref = reference_forward(x, w1, b1, w2, b2)
    assert out.shape == (batch, 1)
    assert jnp.allclose(out, ref, atol=1e-4, rtol=1e-4), "mismatch vs reference"

    print("KERNEL_OK")
</pallas_src>

<mosaic_0001>
module attributes {stable_mosaic.version = 11 : i64} {
  func.func @valuenet_kernel(%arg0: i32, %arg1: memref<512x4xf32, #tpu.memory_space<vmem>>, %arg2: memref<32x4xf32, #tpu.memory_space<vmem>>, %arg3: memref<1x32xf32, #tpu.memory_space<vmem>>, %arg4: memref<1x32xf32, #tpu.memory_space<vmem>>, %arg5: memref<1xf32, #tpu.memory_space<smem>>, %arg6: memref<512x1xf32, #tpu.memory_space<vmem>>) attributes {dimension_semantics = [#tpu.dimension_semantics<arbitrary>], iteration_bounds = array<i64: 1>, scalar_prefetch = 0 : i64, scratch_operands = 0 : i64, tpu.core_type = #tpu.core_type<tc>, window_params = [{transform_indices = @transform_0, window_bounds = array<i64: 512, 4>}, {pipeline_mode = #tpu.pipeline_mode<synchronous>, transform_indices = @transform_1, window_bounds = array<i64: 32, 4>}, {pipeline_mode = #tpu.pipeline_mode<synchronous>, transform_indices = @transform_2, window_bounds = array<i64: 1, 32>}, {pipeline_mode = #tpu.pipeline_mode<synchronous>, transform_indices = @transform_3, window_bounds = array<i64: 1, 32>}, {transform_indices = @transform_4, window_bounds = array<i64: 1>}, {transform_indices = @transform_5, window_bounds = array<i64: 512, 1>}]} {
    %c0 = arith.constant 0 : index
    %c0_0 = arith.constant 0 : index
    %0 = vector.load %arg1[%c0, %c0_0] : memref<512x4xf32, #tpu.memory_space<vmem>>, vector<512x4xf32>
    %c0_1 = arith.constant 0 : index
    %c0_2 = arith.constant 0 : index
    %1 = vector.load %arg2[%c0_1, %c0_2] : memref<32x4xf32, #tpu.memory_space<vmem>>, vector<32x4xf32>
    %cst = arith.constant dense<0.000000e+00> : vector<512x32xf32>
    %2 = tpu.matmul %0, %1, %cst {dimension_numbers = #tpu.dot_dimension_numbers<[1], [1], [0], [0], [0, 0, 1, 0], [], []>} : vector<512x4xf32>, vector<32x4xf32>, vector<512x32xf32> -> vector<512x32xf32>
    %c0_3 = arith.constant 0 : index
    %c0_4 = arith.constant 0 : index
    %3 = vector.load %arg3[%c0_3, %c0_4] : memref<1x32xf32, #tpu.memory_space<vmem>>, vector<1x32xf32>
    %4 = vector.broadcast %3 : vector<1x32xf32> to vector<512x32xf32>
    %5 = arith.addf %2, %4 : vector<512x32xf32>
    %cst_5 = arith.constant 0.000000e+00 : f32
    %6 = vector.broadcast %cst_5 : f32 to vector<512x32xf32>
    %7 = arith.maximumf %5, %6 : vector<512x32xf32>
    %c0_6 = arith.constant 0 : index
    %c0_7 = arith.constant 0 : index
    %8 = vector.load %arg4[%c0_6, %c0_7] : memref<1x32xf32, #tpu.memory_space<vmem>>, vector<1x32xf32>
    %9 = vector.broadcast %8 : vector<1x32xf32> to vector<512x32xf32>
    %10 = arith.mulf %7, %9 : vector<512x32xf32>
    %cst_8 = arith.constant dense<0.000000e+00> : vector<512xf32>
    %11 = vector.multi_reduction <add>, %10, %cst_8 [1] : vector<512x32xf32> to vector<512xf32>
    %12 = vector.shape_cast %11 : vector<512xf32> to vector<512x1xf32>
    %c0_9 = arith.constant 0 : index
    %13 = memref.load %arg5[%c0_9] : memref<1xf32, #tpu.memory_space<smem>>
    %14 = vector.broadcast %13 : f32 to vector<512x1xf32>
    %15 = arith.addf %12, %14 : vector<512x1xf32>
    %c0_10 = arith.constant 0 : index
    %c0_11 = arith.constant 0 : index
    %16 = vector.load %arg6[%c0_10, %c0_11] : memref<512x1xf32, #tpu.memory_space<vmem>>, vector<512x1xf32>
    tpu.vector_store %arg6[%c0_10, %c0_11], %15 {strides = array<i32>} : memref<512x1xf32, #tpu.memory_space<vmem>>, vector<512x1xf32>,
    return
  }
  func.func @transform_0(%arg0: i32) -> (i32, i32) {
    %c0_i32 = arith.constant 0 : i32
    %c0_i32_0 = arith.constant 0 : i32
    return %arg0, %c0_i32 : i32, i32
  }
  func.func @transform_1(%arg0: i32) -> (i32, i32) {
    %c0_i32 = arith.constant 0 : i32
    %c0_i32_0 = arith.constant 0 : i32
    %c0_i32_1 = arith.constant 0 : i32
    return %c0_i32, %c0_i32_0 : i32, i32
  }
  func.func @transform_2(%arg0: i32) -> (i32, i32) {
    %c0_i32 = arith.constant 0 : i32
    %c0_i32_0 = arith.constant 0 : i32
    %c0_i32_1 = arith.constant 0 : i32
    return %c0_i32, %c0_i32_0 : i32, i32
  }
  func.func @transform_3(%arg0: i32) -> (i32, i32) {
    %c0_i32 = arith.constant 0 : i32
    %c0_i32_0 = arith.constant 0 : i32
    %c0_i32_1 = arith.constant 0 : i32
    return %c0_i32, %c0_i32_0 : i32, i32
  }
  func.func @transform_4(%arg0: i32) -> i32 {
    %c0_i32 = arith.constant 0 : i32
    %c0_i32_0 = arith.constant 0 : i32
    return %c0_i32 : i32
  }
  func.func @transform_5(%arg0: i32) -> (i32, i32) {
    %c0_i32 = arith.constant 0 : i32
    %c0_i32_0 = arith.constant 0 : i32
    return %arg0, %c0_i32 : i32, i32
  }
}

</mosaic_0001>

<llo_original>
// kernel: tpu_custom_call.1
$region0: #{tpu_custom_call.1}
  #allocation0 [shape = 'u32[]', space=smem, size = 0x4, offset = 0x4, fixed_abs, tag = 'smem constant byte address 0x4 - core index']
  #allocation1 [shape = 'u32[72,128]{1,0:T(1,128)}', space=vmem, size = 0x9000, scoped, tag = 'internal scratch']
  #allocation2 [shape = 'f32[1]{0:T(128)S(6)}', space=smem, size = 0x200, scoped, tag = 'scoped memory for tpu_custom_call.1']
  %s0 = inlined_call_operand.vmem [shape: f32[512,4], index: 0, kind: input, shape index: {}]
  %s1 = inlined_call_operand.vmem [shape: f32[32,4], index: 1, kind: input, shape index: {}]
  %s2 = inlined_call_operand.vmem [shape: f32[1,32], index: 2, kind: input, shape index: {}]
  %s3 = inlined_call_operand.vmem [shape: f32[1,32], index: 3, kind: input, shape index: {}]
  %s4 = inlined_call_operand.<no memory space> [shape: f32[1], index: 4, kind: input, shape index: {}]
  %s5 = inlined_call_operand.vmem [shape: f32[512,1], index: 5, kind: output, shape index: {}]
  %s6 = sld [smem:[#allocation0]]
  $region30: #{tpu_custom_call.1} parent=0
    _
  %s8 = ssub.s32 1, %s6
  %s9 = scalar_select 0, %s8, %s6
  %10 = sst [smem:[#allocation2]] %s4
  // Predicated region
  $region2: #{tpu_custom_call.1} parent=0 // pred_check
    _
  $region3: #{tpu_custom_call.1} parent=0 // pred_check_branch
    %12 = sbr.rel (0) target = $region5
  $region4: #{tpu_custom_call.1} parent=0 // pred_region
    _
  $region5: #{tpu_custom_call.1} parent=0 // pred_fallthru
    _
  // Predicated region
  $region6: #{tpu_custom_call.1} parent=0 // pred_check
    _
  $region7: #{tpu_custom_call.1} parent=0 // pred_check_branch
    %14 = sbr.rel (0) target = $region9
  $region8: #{tpu_custom_call.1} parent=0 // pred_region
    _
  $region9: #{tpu_custom_call.1} parent=0 // pred_fallthru
    _
  // Predicated region
  $region10: #{tpu_custom_call.1} parent=0 // pred_check
    _
  $region11: #{tpu_custom_call.1} parent=0 // pred_check_branch
    %16 = sbr.rel (0) target = $region13
  $region12: #{tpu_custom_call.1} parent=0 // pred_region
    _
  $region13: #{tpu_custom_call.1} parent=0 // pred_fallthru
    _
  // Predicated region
  $region14: #{tpu_custom_call.1} parent=0 // pred_check
    _
  $region15: #{tpu_custom_call.1} parent=0 // pred_check_branch
    %18 = sbr.rel (0) target = $region17
  $region16: #{tpu_custom_call.1} parent=0 // pred_region
    _
  $region17: #{tpu_custom_call.1} parent=0 // pred_fallthru
    _
  // Predicated region
  $region18: #{tpu_custom_call.1} parent=0 // pred_check
    _
  $region19: #{tpu_custom_call.1} parent=0 // pred_check_branch
    %20 = sbr.rel (0) target = $region21
  $region20: #{tpu_custom_call.1} parent=0 // pred_region
    _
  $region21: #{tpu_custom_call.1} parent=0 // pred_fallthru
    _
  %v21 = vld [vmem:[%s0] sm:$0xff]
  %v22 = vld [vmem:[%s0 + $0x8] sm:$0xff]
  %v23 = vld [vmem:[%s0 + $0x10] sm:$0xff]
  %v24 = vld [vmem:[%s0 + $0x18] sm:$0xff]
  %v25 = vld [vmem:[%s0 + $0x20] sm:$0xff]
  %v26 = vld [vmem:[%s0 + $0x28] sm:$0xff]
  %v27 = vld [vmem:[%s0 + $0x30] sm:$0xff]
  %v28 = vld [vmem:[%s0 + $0x38] sm:$0xff]
  %v29 = vld [vmem:[%s0 + $0x40] sm:$0xff]
  %v30 = vld [vmem:[%s0 + $0x48] sm:$0xff]
  %v31 = vld [vmem:[%s0 + $0x50] sm:$0xff]
  %v32 = vld [vmem:[%s0 + $0x58] sm:$0xff]
  %v33 = vld [vmem:[%s0 + $0x60] sm:$0xff]
  %v34 = vld [vmem:[%s0 + $0x68] sm:$0xff]
  %v35 = vld [vmem:[%s0 + $0x70] sm:$0xff]
  %v36 = vld [vmem:[%s0 + $0x78] sm:$0xff]
  %v37 = vld [vmem:[%s0 + $0x80] sm:$0xff]
  %v38 = vld [vmem:[%s0 + $0x88] sm:$0xff]
  %v39 = vld [vmem:[%s0 + $0x90] sm:$0xff]
  %v40 = vld [vmem:[%s0 + $0x98] sm:$0xff]
  %v41 = vld [vmem:[%s0 + $0xa0] sm:$0xff]
  %v42 = vld [vmem:[%s0 + $0xa8] sm:$0xff]
  %v43 = vld [vmem:[%s0 + $0xb0] sm:$0xff]
  %v44 = vld [vmem:[%s0 + $0xb8] sm:$0xff]
  %v45 = vld [vmem:[%s0 + $0xc0] sm:$0xff]
  %v46 = vld [vmem:[%s0 + $0xc8] sm:$0xff]
  %v47 = vld [vmem:[%s0 + $0xd0] sm:$0xff]
  %v48 = vld [vmem:[%s0 + $0xd8] sm:$0xff]
  %v49 = vld [vmem:[%s0 + $0xe0] sm:$0xff]
  %v50 = vld [vmem:[%s0 + $0xe8] sm:$0xff]
  %v51 = vld [vmem:[%s0 + $0xf0] sm:$0xff]
  %v52 = vld [vmem:[%s0 + $0xf8] sm:$0xff]
  %v53 = vld [vmem:[%s0 + $0x100] sm:$0xff]
  %v54 = vld [vmem:[%s0 + $0x108] sm:$0xff]
  %v55 = vld [vmem:[%s0 + $0x110] sm:$0xff]
  %v56 = vld [vmem:[%s0 + $0x118] sm:$0xff]
  %v57 = vld [vmem:[%s0 + $0x120] sm:$0xff]
  %v58 = vld [vmem:[%s0 + $0x128] sm:$0xff]
  %v59 = vld [vmem:[%s0 + $0x130] sm:$0xff]
  %v60 = vld [vmem:[%s0 + $0x138] sm:$0xff]
  %v61 = vld [vmem:[%s0 + $0x140] sm:$0xff]
  %v62 = vld [vmem:[%s0 + $0x148] sm:$0xff]
  %v63 = vld [vmem:[%s0 + $0x150] sm:$0xff]
  %v64 = vld [vmem:[%s0 + $0x158] sm:$0xff]
  %v65 = vld [vmem:[%s0 + $0x160] sm:$0xff]
  %v66 = vld [vmem:[%s0 + $0x168] sm:$0xff]
  %v67 = vld [vmem:[%s0 + $0x170] sm:$0xff]
  %v68 = vld [vmem:[%s0 + $0x178] sm:$0xff]
  %v69 = vld [vmem:[%s0 + $0x180] sm:$0xff]
  %v70 = vld [vmem:[%s0 + $0x188] sm:$0xff]
  %v71 = vld [vmem:[%s0 + $0x190] sm:$0xff]
  %v72 = vld [vmem:[%s0 + $0x198] sm:$0xff]
  %v73 = vld [vmem:[%s0 + $0x1a0] sm:$0xff]
  %v74 = vld [vmem:[%s0 + $0x1a8] sm:$0xff]
  %v75 = vld [vmem:[%s0 + $0x1b0] sm:$0xff]
  %v76 = vld [vmem:[%s0 + $0x1b8] sm:$0xff]
  %v77 = vld [vmem:[%s0 + $0x1c0] sm:$0xff]
  %v78 = vld [vmem:[%s0 + $0x1c8] sm:$0xff]
  %v79 = vld [vmem:[%s0 + $0x1d0] sm:$0xff]
  %v80 = vld [vmem:[%s0 + $0x1d8] sm:$0xff]
  %v81 = vld [vmem:[%s0 + $0x1e0] sm:$0xff]
  %v82 = vld [vmem:[%s0 + $0x1e8] sm:$0xff]
  %v83 = vld [vmem:[%s0 + $0x1f0] sm:$0xff]
  %v84 = vld [vmem:[%s0 + $0x1f8] sm:$0xff]
  %v85 = vld [vmem:[%s1] sm:$0xff]
  %v86 = vld [vmem:[%s1 + $0x8] sm:$0xff]
  %v87 = vld [vmem:[%s1 + $0x10] sm:$0xff]
  %v88 = vld [vmem:[%s1 + $0x18] sm:$0xff]
  %v89 = vld [vmem:[%s2] sm:$0x1]
  %v91 = vperm.slane %v89, 0
  %vm93 = vcmask 31744
  %v95 = vsel %vm93, %v21, 0
  %v98 = vsel %vm93, %v22, 0
  %v101 = vsel %vm93, %v23, 0
  %v104 = vsel %vm93, %v24, 0
  %v107 = vsel %vm93, %v25, 0
  %v110 = vsel %vm93, %v26, 0
  %v113 = vsel %vm93, %v27, 0
  %v116 = vsel %vm93, %v28, 0
  %v119 = vsel %vm93, %v29, 0
  %v122 = vsel %vm93, %v30, 0
  %v125 = vsel %vm93, %v31, 0
  %v128 = vsel %vm93, %v32, 0
  %v131 = vsel %vm93, %v33, 0
  %v134 = vsel %vm93, %v34, 0
  %v137 = vsel %vm93, %v35, 0
  %v140 = vsel %vm93, %v36, 0
  %v143 = vsel %vm93, %v37, 0
  %v146 = vsel %vm93, %v38, 0
  %v149 = vsel %vm93, %v39, 0
  %v152 = vsel %vm93, %v40, 0
  %v155 = vsel %vm93, %v41, 0
  %v158 = vsel %vm93, %v42, 0
  %v161 = vsel %vm93, %v43, 0
  %v164 = vsel %vm93, %v44, 0
  %v167 = vsel %vm93, %v45, 0
  %v170 = vsel %vm93, %v46, 0
  %v173 = vsel %vm93, %v47, 0
  %v176 = vsel %vm93, %v48, 0
  %v179 = vsel %vm93, %v49, 0
  %v182 = vsel %vm93, %v50, 0
  %v185 = vsel %vm93, %v51, 0
  %v188 = vsel %vm93, %v52, 0
  %v191 = vsel %vm93, %v53, 0
  %v194 = vsel %vm93, %v54, 0
  %v197 = vsel %vm93, %v55, 0
  %v200 = vsel %vm93, %v56, 0
  %v203 = vsel %vm93, %v57, 0
  %v206 = vsel %vm93, %v58, 0
  %v209 = vsel %vm93, %v59, 0
  %v212 = vsel %vm93, %v60, 0
  %v215 = vsel %vm93, %v61, 0
  %v218 = vsel %vm93, %v62, 0
  %v221 = vsel %vm93, %v63, 0
  %v224 = vsel %vm93, %v64, 0
  %v227 = vsel %vm93, %v65, 0
  %v230 = vsel %vm93, %v66, 0
  %v233 = vsel %vm93, %v67, 0
  %v236 = vsel %vm93, %v68, 0
  %v239 = vsel %vm93, %v69, 0
  %v242 = vsel %vm93, %v70, 0
  %v245 = vsel %vm93, %v71, 0
  %v248 = vsel %vm93, %v72, 0
  %v251 = vsel %vm93, %v73, 0
  %v254 = vsel %vm93, %v74, 0
  %v257 = vsel %vm93, %v75, 0
  %v260 = vsel %vm93, %v76, 0
  %v263 = vsel %vm93, %v77, 0
  %v266 = vsel %vm93, %v78, 0
  %v269 = vsel %vm93, %v79, 0
  %v272 = vsel %vm93, %v80, 0
  %v275 = vsel %vm93, %v81, 0
  %v278 = vsel %vm93, %v82, 0
  %v281 = vsel %vm93, %v83, 0
  %v284 = vsel %vm93, %v84, 0
  %v287 = vsel %vm93, %v85, 0
  %v290 = vsel %vm93, %v86, 0
  %v293 = vsel %vm93, %v87, 0
  %v296 = vsel %vm93, %v88, 0
  %298 = vmatpush.xpose.msra.mxu0 0.0
  %299 = vmatpush.xpose.msra.mxu0 0.0
  %300 = vmatpush.xpose.msra.mxu0 0.0
  %301 = vmatpush.xpose.msra.mxu0 0.0
  %302 = vmatpush.xpose.msra.mxu0 0.0
  %303 = vmatpush.xpose.msra.mxu0 0.0
  %304 = vmatpush.xpose.msra.mxu0 0.0
  %305 = vmatpush.xpose.msra.mxu0 0.0
  %306 = vmatpush.xpose.msra.mxu0 0.0
  %307 = vmatpush.xpose.msra.mxu0 0.0
  %308 = vmatpush.xpose.msra.mxu0 0.0
  %309 = vmatpush.xpose.msra.mxu0 0.0
  %310 = vmatpush.xpose.msra.mxu0 %v296
  %311 = vmatpush.xpose.msra.mxu0 %v293
  %312 = vmatpush.xpose.msra.mxu0 %v290
  %313 = vmatpush.xpose.msra.mxu0 %v287
  %314 = vmatmul.f32.gmra.mxu0 %v95
  %v315 = vpop.f32.mrf.mxu0
  %v316 = vadd.f32 %v91, %v315
  %317 = vmatmul.f32.gmra.mxu0 %v98
  %v318 = vpop.f32.mrf.mxu0
  %v319 = vadd.f32 %v91, %v318
  %320 = vmatmul.f32.gmra.mxu0 %v101
  %v321 = vpop.f32.mrf.mxu0
  %v322 = vadd.f32 %v91, %v321
  %323 = vmatmul.f32.gmra.mxu0 %v104
  %v324 = vpop.f32.mrf.mxu0
  %v325 = vadd.f32 %v91, %v324
  %326 = vmatmul.f32.gmra.mxu0 %v107
  %v327 = vpop.f32.mrf.mxu0
  %v328 = vadd.f32 %v91, %v327
  %329 = vmatmul.f32.gmra.mxu0 %v110
  %v330 = vpop.f32.mrf.mxu0
  %v331 = vadd.f32 %v91, %v330
  %332 = vmatmul.f32.gmra.mxu0 %v113
  %v333 = vpop.f32.mrf.mxu0
  %v334 = vadd.f32 %v91, %v333
  %335 = vmatmul.f32.gmra.mxu0 %v116
  %v336 = vpop.f32.mrf.mxu0
  %v337 = vadd.f32 %v91, %v336
  %338 = vmatmul.f32.gmra.mxu0 %v119
  %v339 = vpop.f32.mrf.mxu0
  %v340 = vadd.f32 %v91, %v339
  %341 = vmatmul.f32.gmra.mxu0 %v122
  %v342 = vpop.f32.mrf.mxu0
  %v343 = vadd.f32 %v91, %v342
  %344 = vmatmul.f32.gmra.mxu0 %v125
  %v345 = vpop.f32.mrf.mxu0
  %v346 = vadd.f32 %v91, %v345
  %347 = vmatmul.f32.gmra.mxu0 %v128
  %v348 = vpop.f32.mrf.mxu0
  %v349 = vadd.f32 %v91, %v348
  %350 = vmatmul.f32.gmra.mxu0 %v131
  %v351 = vpop.f32.mrf.mxu0
  %v352 = vadd.f32 %v91, %v351
  %353 = vmatmul.f32.gmra.mxu0 %v134
  %v354 = vpop.f32.mrf.mxu0
  %v355 = vadd.f32 %v91, %v354
  %356 = vmatmul.f32.gmra.mxu0 %v137
  %v357 = vpop.f32.mrf.mxu0
  %v358 = vadd.f32 %v91, %v357
  %359 = vmatmul.f32.gmra.mxu0 %v140
  %v360 = vpop.f32.mrf.mxu0
  %v361 = vadd.f32 %v91, %v360
  %362 = vmatmul.f32.gmra.mxu0 %v143
  %v363 = vpop.f32.mrf.mxu0
  %v364 = vadd.f32 %v91, %v363
  %365 = vmatmul.f32.gmra.mxu0 %v146
  %v366 = vpop.f32.mrf.mxu0
  %v367 = vadd.f32 %v91, %v366
  %368 = vmatmul.f32.gmra.mxu0 %v149
  %v369 = vpop.f32.mrf.mxu0
  %v370 = vadd.f32 %v91, %v369
  %371 = vmatmul.f32.gmra.mxu0 %v152
  %v372 = vpop.f32.mrf.mxu0
  %v373 = vadd.f32 %v91, %v372
  %374 = vmatmul.f32.gmra.mxu0 %v155
  %v375 = vpop.f32.mrf.mxu0
  %v376 = vadd.f32 %v91, %v375
  %377 = vmatmul.f32.gmra.mxu0 %v158
  %v378 = vpop.f32.mrf.mxu0
  %v379 = vadd.f32 %v91, %v378
  %380 = vmatmul.f32.gmra.mxu0 %v161
  %v381 = vpop.f32.mrf.mxu0
  %v382 = vadd.f32 %v91, %v381
  %383 = vmatmul.f32.gmra.mxu0 %v164
  %v384 = vpop.f32.mrf.mxu0
  %v385 = vadd.f32 %v91, %v384
  %386 = vmatmul.f32.gmra.mxu0 %v167
  %v387 = vpop.f32.mrf.mxu0
  %v388 = vadd.f32 %v91, %v387
  %389 = vmatmul.f32.gmra.mxu0 %v170
  %v390 = vpop.f32.mrf.mxu0
  %v391 = vadd.f32 %v91, %v390
  %392 = vmatmul.f32.gmra.mxu0 %v173
  %v393 = vpop.f32.mrf.mxu0
  %v394 = vadd.f32 %v91, %v393
  %395 = vmatmul.f32.gmra.mxu0 %v176
  %v396 = vpop.f32.mrf.mxu0
  %v397 = vadd.f32 %v91, %v396
  %398 = vmatmul.f32.gmra.mxu0 %v179
  %v399 = vpop.f32.mrf.mxu0
  %v400 = vadd.f32 %v91, %v399
  %401 = vmatmul.f32.gmra.mxu0 %v182
  %v402 = vpop.f32.mrf.mxu0
  %v403 = vadd.f32 %v91, %v402
  %404 = vmatmul.f32.gmra.mxu0 %v185
  %v405 = vpop.f32.mrf.mxu0
  %v406 = vadd.f32 %v91, %v405
  %407 = vmatmul.f32.gmra.mxu0 %v188
  %v408 = vpop.f32.mrf.mxu0
  %v409 = vadd.f32 %v91, %v408
  %410 = vmatmul.f32.gmra.mxu0 %v191
  %v411 = vpop.f32.mrf.mxu0
  %v412 = vadd.f32 %v91, %v411
  %413 = vmatmul.f32.gmra.mxu0 %v194
  %v414 = vpop.f32.mrf.mxu0
  %v415 = vadd.f32 %v91, %v414
  %416 = vmatmul.f32.gmra.mxu0 %v197
  %v417 = vpop.f32.mrf.mxu0
  %v418 = vadd.f32 %v91, %v417
  %419 = vmatmul.f32.gmra.mxu0 %v200
  %v420 = vpop.f32.mrf.mxu0
  %v421 = vadd.f32 %v91, %v420
  %422 = vmatmul.f32.gmra.mxu0 %v203
  %v423 = vpop.f32.mrf.mxu0
  %v424 = vadd.f32 %v91, %v423
  %425 = vmatmul.f32.gmra.mxu0 %v206
  %v426 = vpop.f32.mrf.mxu0
  %v427 = vadd.f32 %v91, %v426
  %428 = vmatmul.f32.gmra.mxu0 %v209
  %v429 = vpop.f32.mrf.mxu0
  %v430 = vadd.f32 %v91, %v429
  %431 = vmatmul.f32.gmra.mxu0 %v212
  %v432 = vpop.f32.mrf.mxu0
  %v433 = vadd.f32 %v91, %v432
  %434 = vmatmul.f32.gmra.mxu0 %v215
  %v435 = vpop.f32.mrf.mxu0
  %v436 = vadd.f32 %v91, %v435
  %437 = vmatmul.f32.gmra.mxu0 %v218
  %v438 = vpop.f32.mrf.mxu0
  %v439 = vadd.f32 %v91, %v438
  %440 = vmatmul.f32.gmra.mxu0 %v221
  %v441 = vpop.f32.mrf.mxu0
  %v442 = vadd.f32 %v91, %v441
  %443 = vmatmul.f32.gmra.mxu0 %v224
  %v444 = vpop.f32.mrf.mxu0
  %v445 = vadd.f32 %v91, %v444
  %446 = vmatmul.f32.gmra.mxu0 %v227
  %v447 = vpop.f32.mrf.mxu0
  %v448 = vadd.f32 %v91, %v447
  %449 = vmatmul.f32.gmra.mxu0 %v230
  %v450 = vpop.f32.mrf.mxu0
  %v451 = vadd.f32 %v91, %v450
  %452 = vmatmul.f32.gmra.mxu0 %v233
  %v453 = vpop.f32.mrf.mxu0
  %v454 = vadd.f32 %v91, %v453
  %455 = vmatmul.f32.gmra.mxu0 %v236
  %v456 = vpop.f32.mrf.mxu0
  %v457 = vadd.f32 %v91, %v456
  %458 = vmatmul.f32.gmra.mxu0 %v239
  %v459 = vpop.f32.mrf.mxu0
  %v460 = vadd.f32 %v91, %v459
  %461 = vmatmul.f32.gmra.mxu0 %v242
  %v462 = vpop.f32.mrf.mxu0
  %v463 = vadd.f32 %v91, %v462
  %464 = vmatmul.f32.gmra.mxu0 %v245
  %v465 = vpop.f32.mrf.mxu0
  %v466 = vadd.f32 %v91, %v465
  %467 = vmatmul.f32.gmra.mxu0 %v248
  %v468 = vpop.f32.mrf.mxu0
  %v469 = vadd.f32 %v91, %v468
  %470 = vmatmul.f32.gmra.mxu0 %v251
  %v471 = vpop.f32.mrf.mxu0
  %v472 = vadd.f32 %v91, %v471
  %473 = vmatmul.f32.gmra.mxu0 %v254
  %v474 = vpop.f32.mrf.mxu0
  %v475 = vadd.f32 %v91, %v474
  %476 = vmatmul.f32.gmra.mxu0 %v257
  %v477 = vpop.f32.mrf.mxu0
  %v478 = vadd.f32 %v91, %v477
  %479 = vmatmul.f32.gmra.mxu0 %v260
  %v480 = vpop.f32.mrf.mxu0
  %v481 = vadd.f32 %v91, %v480
  %482 = vmatmul.f32.gmra.mxu0 %v263
  %v483 = vpop.f32.mrf.mxu0
  %v484 = vadd.f32 %v91, %v483
  %485 = vmatmul.f32.gmra.mxu0 %v266
  %v486 = vpop.f32.mrf.mxu0
  %v487 = vadd.f32 %v91, %v486
  %488 = vmatmul.f32.gmra.mxu0 %v269
  %v489 = vpop.f32.mrf.mxu0
  %v490 = vadd.f32 %v91, %v489
  %491 = vmatmul.f32.gmra.mxu0 %v272
  %v492 = vpop.f32.mrf.mxu0
  %v493 = vadd.f32 %v91, %v492
  %494 = vmatmul.f32.gmra.mxu0 %v275
  %v495 = vpop.f32.mrf.mxu0
  %v496 = vadd.f32 %v91, %v495
  %497 = vmatmul.f32.gmra.mxu0 %v278
  %v498 = vpop.f32.mrf.mxu0
  %v499 = vadd.f32 %v91, %v498
  %500 = vmatmul.f32.gmra.mxu0 %v281
  %v501 = vpop.f32.mrf.mxu0
  %v502 = vadd.f32 %v91, %v501
  %503 = vmatmul.f32.gmra.mxu0 %v284
  %v504 = vpop.f32.mrf.mxu0
  %v505 = vadd.f32 %v91, %v504
  %506 = vdwg.mxu0
  %v507 = vmax.f32 %v316, 0.0
  %v508 = vmax.f32 %v319, 0.0
  %v509 = vmax.f32 %v322, 0.0
  %v510 = vmax.f32 %v325, 0.0
  %v511 = vmax.f32 %v328, 0.0
  %v512 = vmax.f32 %v331, 0.0
  %v513 = vmax.f32 %v334, 0.0
  %v514 = vmax.f32 %v337, 0.0
  %v515 = vmax.f32 %v340, 0.0
  %v516 = vmax.f32 %v343, 0.0
  %v517 = vmax.f32 %v346, 0.0
  %v518 = vmax.f32 %v349, 0.0
  %v519 = vmax.f32 %v352, 0.0
  %v520 = vmax.f32 %v355, 0.0
  %v521 = vmax.f32 %v358, 0.0
  %v522 = vmax.f32 %v361, 0.0
  %v523 = vmax.f32 %v364, 0.0
  %v524 = vmax.f32 %v367, 0.0
  %v525 = vmax.f32 %v370, 0.0
  %v526 = vmax.f32 %v373, 0.0
  %v527 = vmax.f32 %v376, 0.0
  %v528 = vmax.f32 %v379, 0.0
  %v529 = vmax.f32 %v382, 0.0
  %v530 = vmax.f32 %v385, 0.0
  %v531 = vmax.f32 %v388, 0.0
  %v532 = vmax.f32 %v391, 0.0
  %v533 = vmax.f32 %v394, 0.0
  %v534 = vmax.f32 %v397, 0.0
  %v535 = vmax.f32 %v400, 0.0
  %v536 = vmax.f32 %v403, 0.0
  %v537 = vmax.f32 %v406, 0.0
  %v538 = vmax.f32 %v409, 0.0
  %v539 = vmax.f32 %v412, 0.0
  %v540 = vmax.f32 %v415, 0.0
  %v541 = vmax.f32 %v418, 0.0
  %v542 = vmax.f32 %v421, 0.0
  %v543 = vmax.f32 %v424, 0.0
  %v544 = vmax.f32 %v427, 0.0
  %v545 = vmax.f32 %v430, 0.0
  %v546 = vmax.f32 %v433, 0.0
  %v547 = vmax.f32 %v436, 0.0
  %v548 = vmax.f32 %v439, 0.0
  %v549 = vmax.f32 %v442, 0.0
  %v550 = vmax.f32 %v445, 0.0
  %v551 = vmax.f32 %v448, 0.0
  %v552 = vmax.f32 %v451, 0.0
  %v553 = vmax.f32 %v454, 0.0
  %v554 = vmax.f32 %v457, 0.0
  %v555 = vmax.f32 %v460, 0.0
  %v556 = vmax.f32 %v463, 0.0
  %v557 = vmax.f32 %v466, 0.0
  %v558 = vmax.f32 %v469, 0.0
  %v559 = vmax.f32 %v472, 0.0
  %v560 = vmax.f32 %v475, 0.0
  %v561 = vmax.f32 %v478, 0.0
  %v562 = vmax.f32 %v481, 0.0
  %v563 = vmax.f32 %v484, 0.0
  %v564 = vmax.f32 %v487, 0.0
  %v565 = vmax.f32 %v490, 0.0
  %v566 = vmax.f32 %v493, 0.0
  %v567 = vmax.f32 %v496, 0.0
  %v568 = vmax.f32 %v499, 0.0
  %v569 = vmax.f32 %v502, 0.0
  %v570 = vmax.f32 %v505, 0.0
  %v571 = vld [vmem:[%s3] sm:$0x1]
  %v573 = vperm.slane %v571, 0
  %v575 = vmul.f32 %v507, %v573
  %v576 = vmul.f32 %v508, %v573
  %v577 = vmul.f32 %v509, %v573
  %v578 = vmul.f32 %v510, %v573
  %v579 = vmul.f32 %v511, %v573
  %v580 = vmul.f32 %v512, %v573
  %v581 = vmul.f32 %v513, %v573
  %v582 = vmul.f32 %v514, %v573
  %v583 = vmul.f32 %v515, %v573
  %v584 = vmul.f32 %v516, %v573
  %v585 = vmul.f32 %v517, %v573
  %v586 = vmul.f32 %v518, %v573
  %v587 = vmul.f32 %v519, %v573
  %v588 = vmul.f32 %v520, %v573
  %v589 = vmul.f32 %v521, %v573
  %v590 = vmul.f32 %v522, %v573
  %v591 = vmul.f32 %v523, %v573
  %v592 = vmul.f32 %v524, %v573
  %v593 = vmul.f32 %v525, %v573
  %v594 = vmul.f32 %v526, %v573
  %v595 = vmul.f32 %v527, %v573
  %v596 = vmul.f32 %v528, %v573
  %v597 = vmul.f32 %v529, %v573
  %v598 = vmul.f32 %v530, %v573
  %v599 = vmul.f32 %v531, %v573
  %v600 = vmul.f32 %v532, %v573
  %v601 = vmul.f32 %v533, %v573
  %v602 = vmul.f32 %v534, %v573
  %v603 = vmul.f32 %v535, %v573
  %v604 = vmul.f32 %v536, %v573
  %v605 = vmul.f32 %v537, %v573
  %v606 = vmul.f32 %v538, %v573
  %v607 = vmul.f32 %v539, %v573
  %v608 = vmul.f32 %v540, %v573
  %v609 = vmul.f32 %v541, %v573
  %v610 = vmul.f32 %v542, %v573
  %v611 = vmul.f32 %v543, %v573
  %v612 = vmul.f32 %v544, %v573
  %v613 = vmul.f32 %v545, %v573
  %v614 = vmul.f32 %v546, %v573
  %v615 = vmul.f32 %v547, %v573
  %v616 = vmul.f32 %v548, %v573
  %v617 = vmul.f32 %v549, %v573
  %v618 = vmul.f32 %v550, %v573
  %v619 = vmul.f32 %v551, %v573
  %v620 = vmul.f32 %v552, %v573
  %v621 = vmul.f32 %v553, %v573
  %v622 = vmul.f32 %v554, %v573
  %v623 = vmul.f32 %v555, %v573
  %v624 = vmul.f32 %v556, %v573
  %v625 = vmul.f32 %v557, %v573
  %v626 = vmul.f32 %v558, %v573
  %v627 = vmul.f32 %v559, %v573
  %v628 = vmul.f32 %v560, %v573
  %v629 = vmul.f32 %v561, %v573
  %v630 = vmul.f32 %v562, %v573
  %v631 = vmul.f32 %v563, %v573
  %v632 = vmul.f32 %v564, %v573
  %v633 = vmul.f32 %v565, %v573
  %v634 = vmul.f32 %v566, %v573
  %v635 = vmul.f32 %v567, %v573
  %v636 = vmul.f32 %v568, %v573
  %v637 = vmul.f32 %v569, %v573
  %v638 = vmul.f32 %v570, %v573
  %vm639 = vcmask 261120
  %v640 = vsel %vm639, %v575, 0.0
  %641 = vadd.xlane.f32.xlu0 %v640
  %v642 = vpop.xlane.xlu0 %641
  %v643 = vsel %vm639, %v576, 0.0
  %644 = vadd.xlane.f32.xlu0 %v643
  %v645 = vpop.xlane.xlu0 %644
  %v646 = vsel %vm639, %v577, 0.0
  %647 = vadd.xlane.f32.xlu0 %v646
  %v648 = vpop.xlane.xlu0 %647
  %v649 = vsel %vm639, %v578, 0.0
  %650 = vadd.xlane.f32.xlu0 %v649
  %v651 = vpop.xlane.xlu0 %650
  %v652 = vsel %vm639, %v579, 0.0
  %653 = vadd.xlane.f32.xlu0 %v652
  %v654 = vpop.xlane.xlu0 %653
  %v655 = vsel %vm639, %v580, 0.0
  %656 = vadd.xlane.f32.xlu0 %v655
  %v657 = vpop.xlane.xlu0 %656
  %v658 = vsel %vm639, %v581, 0.0
  %659 = vadd.xlane.f32.xlu0 %v658
  %v660 = vpop.xlane.xlu0 %659
  %v661 = vsel %vm639, %v582, 0.0
  %662 = vadd.xlane.f32.xlu0 %v661
  %v663 = vpop.xlane.xlu0 %662
  %v664 = vsel %vm639, %v583, 0.0
  %665 = vadd.xlane.f32.xlu0 %v664
  %v666 = vpop.xlane.xlu0 %665
  %v667 = vsel %vm639, %v584, 0.0
  %668 = vadd.xlane.f32.xlu0 %v667
  %v669 = vpop.xlane.xlu0 %668
  %v670 = vsel %vm639, %v585, 0.0
  %671 = vadd.xlane.f32.xlu0 %v670
  %v672 = vpop.xlane.xlu0 %671
  %v673 = vsel %vm639, %v586, 0.0
  %674 = vadd.xlane.f32.xlu0 %v673
  %v675 = vpop.xlane.xlu0 %674
  %v676 = vsel %vm639, %v587, 0.0
  %677 = vadd.xlane.f32.xlu0 %v676
  %v678 = vpop.xlane.xlu0 %677
  %v679 = vsel %vm639, %v588, 0.0
  %680 = vadd.xlane.f32.xlu0 %v679
  %v681 = vpop.xlane.xlu0 %680
  %v682 = vsel %vm639, %v589, 0.0
  %683 = vadd.xlane.f32.xlu0 %v682
  %v684 = vpop.xlane.xlu0 %683
  %v685 = vsel %vm639, %v590, 0.0
  %686 = vadd.xlane.f32.xlu0 %v685
  %v687 = vpop.xlane.xlu0 %686
  %v688 = vsel %vm639, %v591, 0.0
  %689 = vadd.xlane.f32.xlu0 %v688
  %v690 = vpop.xlane.xlu0 %689
  %v691 = vsel %vm639, %v592, 0.0
  %692 = vadd.xlane.f32.xlu0 %v691
  %v693 = vpop.xlane.xlu0 %692
  %v694 = vsel %vm639, %v593, 0.0
  %695 = vadd.xlane.f32.xlu0 %v694
  %v696 = vpop.xlane.xlu0 %695
  %v697 = vsel %vm639, %v594, 0.0
  %698 = vadd.xlane.f32.xlu0 %v697
  %v699 = vpop.xlane.xlu0 %698
  %v700 = vsel %vm639, %v595, 0.0
  %701 = vadd.xlane.f32.xlu0 %v700
  %v702 = vpop.xlane.xlu0 %701
  %v703 = vsel %vm639, %v596, 0.0
  %704 = vadd.xlane.f32.xlu0 %v703
  %v705 = vpop.xlane.xlu0 %704
  %v706 = vsel %vm639, %v597, 0.0
  %707 = vadd.xlane.f32.xlu0 %v706
  %v708 = vpop.xlane.xlu0 %707
  %v709 = vsel %vm639, %v598, 0.0
  %710 = vadd.xlane.f32.xlu0 %v709
  %v711 = vpop.xlane.xlu0 %710
  %v712 = vsel %vm639, %v599, 0.0
  %713 = vadd.xlane.f32.xlu0 %v712
  %v714 = vpop.xlane.xlu0 %713
  %v715 = vsel %vm639, %v600, 0.0
  %716 = vadd.xlane.f32.xlu0 %v715
  %v717 = vpop.xlane.xlu0 %716
  %v718 = vsel %vm639, %v601, 0.0
  %719 = vadd.xlane.f32.xlu0 %v718
  %v720 = vpop.xlane.xlu0 %719
  %v721 = vsel %vm639, %v602, 0.0
  %722 = vadd.xlane.f32.xlu0 %v721
  %v723 = vpop.xlane.xlu0 %722
  %v724 = vsel %vm639, %v603, 0.0
  %725 = vadd.xlane.f32.xlu0 %v724
  %v726 = vpop.xlane.xlu0 %725
  %v727 = vsel %vm639, %v604, 0.0
  %728 = vadd.xlane.f32.xlu0 %v727
  %v729 = vpop.xlane.xlu0 %728
  %v730 = vsel %vm639, %v605, 0.0
  %731 = vadd.xlane.f32.xlu0 %v730
  %v732 = vpop.xlane.xlu0 %731
  %v733 = vsel %vm639, %v606, 0.0
  %734 = vadd.xlane.f32.xlu0 %v733
  %v735 = vpop.xlane.xlu0 %734
  %v736 = vsel %vm639, %v607, 0.0
  %737 = vadd.xlane.f32.xlu0 %v736
  %v738 = vpop.xlane.xlu0 %737
  %v739 = vsel %vm639, %v608, 0.0
  %740 = vadd.xlane.f32.xlu0 %v739
  %v741 = vpop.xlane.xlu0 %740
  %v742 = vsel %vm639, %v609, 0.0
  %743 = vadd.xlane.f32.xlu0 %v742
  %v744 = vpop.xlane.xlu0 %743
  %v745 = vsel %vm639, %v610, 0.0
  %746 = vadd.xlane.f32.xlu0 %v745
  %v747 = vpop.xlane.xlu0 %746
  %v748 = vsel %vm639, %v611, 0.0
  %749 = vadd.xlane.f32.xlu0 %v748
  %v750 = vpop.xlane.xlu0 %749
  %v751 = vsel %vm639, %v612, 0.0
  %752 = vadd.xlane.f32.xlu0 %v751
  %v753 = vpop.xlane.xlu0 %752
  %v754 = vsel %vm639, %v613, 0.0
  %755 = vadd.xlane.f32.xlu0 %v754
  %v756 = vpop.xlane.xlu0 %755
  %v757 = vsel %vm639, %v614, 0.0
  %758 = vadd.xlane.f32.xlu0 %v757
  %v759 = vpop.xlane.xlu0 %758
  %v760 = vsel %vm639, %v615, 0.0
  %761 = vadd.xlane.f32.xlu0 %v760
  %v762 = vpop.xlane.xlu0 %761
  %v763 = vsel %vm639, %v616, 0.0
  %764 = vadd.xlane.f32.xlu0 %v763
  %v765 = vpop.xlane.xlu0 %764
  %v766 = vsel %vm639, %v617, 0.0
  %767 = vadd.xlane.f32.xlu0 %v766
  %v768 = vpop.xlane.xlu0 %767
  %v769 = vsel %vm639, %v618, 0.0
  %770 = vadd.xlane.f32.xlu0 %v769
  %v771 = vpop.xlane.xlu0 %770
  %v772 = vsel %vm639, %v619, 0.0
  %773 = vadd.xlane.f32.xlu0 %v772
  %v774 = vpop.xlane.xlu0 %773
  %v775 = vsel %vm639, %v620, 0.0
  %776 = vadd.xlane.f32.xlu0 %v775
  %v777 = vpop.xlane.xlu0 %776
  %v778 = vsel %vm639, %v621, 0.0
  %779 = vadd.xlane.f32.xlu0 %v778
  %v780 = vpop.xlane.xlu0 %779
  %v781 = vsel %vm639, %v622, 0.0
  %782 = vadd.xlane.f32.xlu0 %v781
  %v783 = vpop.xlane.xlu0 %782
  %v784 = vsel %vm639, %v623, 0.0
  %785 = vadd.xlane.f32.xlu0 %v784
  %v786 = vpop.xlane.xlu0 %785
  %v787 = vsel %vm639, %v624, 0.0
  %788 = vadd.xlane.f32.xlu0 %v787
  %v789 = vpop.xlane.xlu0 %788
  %v790 = vsel %vm639, %v625, 0.0
  %791 = vadd.xlane.f32.xlu0 %v790
  %v792 = vpop.xlane.xlu0 %791
  %v793 = vsel %vm639, %v626, 0.0
  %794 = vadd.xlane.f32.xlu0 %v793
  %v795 = vpop.xlane.xlu0 %794
  %v796 = vsel %vm639, %v627, 0.0
  %797 = vadd.xlane.f32.xlu0 %v796
  %v798 = vpop.xlane.xlu0 %797
  %v799 = vsel %vm639, %v628, 0.0
  %800 = vadd.xlane.f32.xlu0 %v799
  %v801 = vpop.xlane.xlu0 %800
  %v802 = vsel %vm639, %v629, 0.0
  %803 = vadd.xlane.f32.xlu0 %v802
  %v804 = vpop.xlane.xlu0 %803
  %v805 = vsel %vm639, %v630, 0.0
  %806 = vadd.xlane.f32.xlu0 %v805
  %v807 = vpop.xlane.xlu0 %806
  %v808 = vsel %vm639, %v631, 0.0
  %809 = vadd.xlane.f32.xlu0 %v808
  %v810 = vpop.xlane.xlu0 %809
  %v811 = vsel %vm639, %v632, 0.0
  %812 = vadd.xlane.f32.xlu0 %v811
  %v813 = vpop.xlane.xlu0 %812
  %v814 = vsel %vm639, %v633, 0.0
  %815 = vadd.xlane.f32.xlu0 %v814
  %v816 = vpop.xlane.xlu0 %815
  %v817 = vsel %vm639, %v634, 0.0
  %818 = vadd.xlane.f32.xlu0 %v817
  %v819 = vpop.xlane.xlu0 %818
  %v820 = vsel %vm639, %v635, 0.0
  %821 = vadd.xlane.f32.xlu0 %v820
  %v822 = vpop.xlane.xlu0 %821
  %v823 = vsel %vm639, %v636, 0.0
  %824 = vadd.xlane.f32.xlu0 %v823
  %v825 = vpop.xlane.xlu0 %824
  %v826 = vsel %vm639, %v637, 0.0
  %827 = vadd.xlane.f32.xlu0 %v826
  %v828 = vpop.xlane.xlu0 %827
  %v829 = vsel %vm639, %v638, 0.0
  %830 = vadd.xlane.f32.xlu0 %v829
  %v831 = vpop.xlane.xlu0 %830
  %s832 = sld [smem:[#allocation2]]
  %v833 = vstv %s832
  %v834 = vadd.f32 %v642, %v833
  %v835 = vadd.f32 %v645, %v833
  %v836 = vadd.f32 %v648, %v833
  %v837 = vadd.f32 %v651, %v833
  %v838 = vadd.f32 %v654, %v833
  %v839 = vadd.f32 %v657, %v833
  %v840 = vadd.f32 %v660, %v833
  %v841 = vadd.f32 %v663, %v833
  %v842 = vadd.f32 %v666, %v833
  %v843 = vadd.f32 %v669, %v833
  %v844 = vadd.f32 %v672, %v833
  %v845 = vadd.f32 %v675, %v833
  %v846 = vadd.f32 %v678, %v833
  %v847 = vadd.f32 %v681, %v833
  %v848 = vadd.f32 %v684, %v833
  %v849 = vadd.f32 %v687, %v833
  %v850 = vadd.f32 %v690, %v833
  %v851 = vadd.f32 %v693, %v833
  %v852 = vadd.f32 %v696, %v833
  %v853 = vadd.f32 %v699, %v833
  %v854 = vadd.f32 %v702, %v833
  %v855 = vadd.f32 %v705, %v833
  %v856 = vadd.f32 %v708, %v833
  %v857 = vadd.f32 %v711, %v833
  %v858 = vadd.f32 %v714, %v833
  %v859 = vadd.f32 %v717, %v833
  %v860 = vadd.f32 %v720, %v833
  %v861 = vadd.f32 %v723, %v833
  %v862 = vadd.f32 %v726, %v833
  %v863 = vadd.f32 %v729, %v833
  %v864 = vadd.f32 %v732, %v833
  %v865 = vadd.f32 %v735, %v833
  %v866 = vadd.f32 %v738, %v833
  %v867 = vadd.f32 %v741, %v833
  %v868 = vadd.f32 %v744, %v833
  %v869 = vadd.f32 %v747, %v833
  %v870 = vadd.f32 %v750, %v833
  %v871 = vadd.f32 %v753, %v833
  %v872 = vadd.f32 %v756, %v833
  %v873 = vadd.f32 %v759, %v833
  %v874 = vadd.f32 %v762, %v833
  %v875 = vadd.f32 %v765, %v833
  %v876 = vadd.f32 %v768, %v833
  %v877 = vadd.f32 %v771, %v833
  %v878 = vadd.f32 %v774, %v833
  %v879 = vadd.f32 %v777, %v833
  %v880 = vadd.f32 %v780, %v833
  %v881 = vadd.f32 %v783, %v833
  %v882 = vadd.f32 %v786, %v833
  %v883 = vadd.f32 %v789, %v833
  %v884 = vadd.f32 %v792, %v833
  %v885 = vadd.f32 %v795, %v833
  %v886 = vadd.f32 %v798, %v833
  %v887 = vadd.f32 %v801, %v833
  %v888 = vadd.f32 %v804, %v833
  %v889 = vadd.f32 %v807, %v833
  %v890 = vadd.f32 %v810, %v833
  %v891 = vadd.f32 %v813, %v833
  %v892 = vadd.f32 %v816, %v833
  %v893 = vadd.f32 %v819, %v833
  %v894 = vadd.f32 %v822, %v833
  %v895 = vadd.f32 %v825, %v833
  %v896 = vadd.f32 %v828, %v833
  %v897 = vadd.f32 %v831, %v833
  %vm898 = vcmask 7168
  %899 = vst.msk [vmem:[%s5] sm:$0xff] %vm898, %v834
  %900 = vst.msk [vmem:[%s5 + $0x8] sm:$0xff] %vm898, %v835
  %901 = vst.msk [vmem:[%s5 + $0x10] sm:$0xff] %vm898, %v836
  %902 = vst.msk [vmem:[%s5 + $0x18] sm:$0xff] %vm898, %v837
  %903 = vst.msk [vmem:[%s5 + $0x20] sm:$0xff] %vm898, %v838
  %904 = vst.msk [vmem:[%s5 + $0x28] sm:$0xff] %vm898, %v839
  %905 = vst.msk [vmem:[%s5 + $0x30] sm:$0xff] %vm898, %v840
  %906 = vst.msk [vmem:[%s5 + $0x38] sm:$0xff] %vm898, %v841
  %907 = vst.msk [vmem:[%s5 + $0x40] sm:$0xff] %vm898, %v842
  %908 = vst.msk [vmem:[%s5 + $0x48] sm:$0xff] %vm898, %v843
  %909 = vst.msk [vmem:[%s5 + $0x50] sm:$0xff] %vm898, %v844
  %910 = vst.msk [vmem:[%s5 + $0x58] sm:$0xff] %vm898, %v845
  %911 = vst.msk [vmem:[%s5 + $0x60] sm:$0xff] %vm898, %v846
  %912 = vst.msk [vmem:[%s5 + $0x68] sm:$0xff] %vm898, %v847
  %913 = vst.msk [vmem:[%s5 + $0x70] sm:$0xff] %vm898, %v848
  %914 = vst.msk [vmem:[%s5 + $0x78] sm:$0xff] %vm898, %v849
  %915 = vst.msk [vmem:[%s5 + $0x80] sm:$0xff] %vm898, %v850
  %916 = vst.msk [vmem:[%s5 + $0x88] sm:$0xff] %vm898, %v851
  %917 = vst.msk [vmem:[%s5 + $0x90] sm:$0xff] %vm898, %v852
  %918 = vst.msk [vmem:[%s5 + $0x98] sm:$0xff] %vm898, %v853
  %919 = vst.msk [vmem:[%s5 + $0xa0] sm:$0xff] %vm898, %v854
  %920 = vst.msk [vmem:[%s5 + $0xa8] sm:$0xff] %vm898, %v855
  %921 = vst.msk [vmem:[%s5 + $0xb0] sm:$0xff] %vm898, %v856
  %922 = vst.msk [vmem:[%s5 + $0xb8] sm:$0xff] %vm898, %v857
  %923 = vst.msk [vmem:[%s5 + $0xc0] sm:$0xff] %vm898, %v858
  %924 = vst.msk [vmem:[%s5 + $0xc8] sm:$0xff] %vm898, %v859
  %925 = vst.msk [vmem:[%s5 + $0xd0] sm:$0xff] %vm898, %v860
  %926 = vst.msk [vmem:[%s5 + $0xd8] sm:$0xff] %vm898, %v861
  %927 = vst.msk [vmem:[%s5 + $0xe0] sm:$0xff] %vm898, %v862
  %928 = vst.msk [vmem:[%s5 + $0xe8] sm:$0xff] %vm898, %v863
  %929 = vst.msk [vmem:[%s5 + $0xf0] sm:$0xff] %vm898, %v864
  %930 = vst.msk [vmem:[%s5 + $0xf8] sm:$0xff] %vm898, %v865
  %931 = vst.msk [vmem:[%s5 + $0x100] sm:$0xff] %vm898, %v866
  %932 = vst.msk [vmem:[%s5 + $0x108] sm:$0xff] %vm898, %v867
  %933 = vst.msk [vmem:[%s5 + $0x110] sm:$0xff] %vm898, %v868
  %934 = vst.msk [vmem:[%s5 + $0x118] sm:$0xff] %vm898, %v869
  %935 = vst.msk [vmem:[%s5 + $0x120] sm:$0xff] %vm898, %v870
  %936 = vst.msk [vmem:[%s5 + $0x128] sm:$0xff] %vm898, %v871
  %937 = vst.msk [vmem:[%s5 + $0x130] sm:$0xff] %vm898, %v872
  %938 = vst.msk [vmem:[%s5 + $0x138] sm:$0xff] %vm898, %v873
  %939 = vst.msk [vmem:[%s5 + $0x140] sm:$0xff] %vm898, %v874
  %940 = vst.msk [vmem:[%s5 + $0x148] sm:$0xff] %vm898, %v875
  %941 = vst.msk [vmem:[%s5 + $0x150] sm:$0xff] %vm898, %v876
  %942 = vst.msk [vmem:[%s5 + $0x158] sm:$0xff] %vm898, %v877
  %943 = vst.msk [vmem:[%s5 + $0x160] sm:$0xff] %vm898, %v878
  %944 = vst.msk [vmem:[%s5 + $0x168] sm:$0xff] %vm898, %v879
  %945 = vst.msk [vmem:[%s5 + $0x170] sm:$0xff] %vm898, %v880
  %946 = vst.msk [vmem:[%s5 + $0x178] sm:$0xff] %vm898, %v881
  %947 = vst.msk [vmem:[%s5 + $0x180] sm:$0xff] %vm898, %v882
  %948 = vst.msk [vmem:[%s5 + $0x188] sm:$0xff] %vm898, %v883
  %949 = vst.msk [vmem:[%s5 + $0x190] sm:$0xff] %vm898, %v884
  %950 = vst.msk [vmem:[%s5 + $0x198] sm:$0xff] %vm898, %v885
  %951 = vst.msk [vmem:[%s5 + $0x1a0] sm:$0xff] %vm898, %v886
  %952 = vst.msk [vmem:[%s5 + $0x1a8] sm:$0xff] %vm898, %v887
  %953 = vst.msk [vmem:[%s5 + $0x1b0] sm:$0xff] %vm898, %v888
  %954 = vst.msk [vmem:[%s5 + $0x1b8] sm:$0xff] %vm898, %v889
  %955 = vst.msk [vmem:[%s5 + $0x1c0] sm:$0xff] %vm898, %v890
  %956 = vst.msk [vmem:[%s5 + $0x1c8] sm:$0xff] %vm898, %v891
  %957 = vst.msk [vmem:[%s5 + $0x1d0] sm:$0xff] %vm898, %v892
  %958 = vst.msk [vmem:[%s5 + $0x1d8] sm:$0xff] %vm898, %v893
  %959 = vst.msk [vmem:[%s5 + $0x1e0] sm:$0xff] %vm898, %v894
  %960 = vst.msk [vmem:[%s5 + $0x1e8] sm:$0xff] %vm898, %v895
  %961 = vst.msk [vmem:[%s5 + $0x1f0] sm:$0xff] %vm898, %v896
  %962 = vst.msk [vmem:[%s5 + $0x1f8] sm:$0xff] %vm898, %v897
  // Predicated region
  $region22: #{tpu_custom_call.1} parent=0 // pred_check
    _
  $region23: #{tpu_custom_call.1} parent=0 // pred_check_branch
    %964 = sbr.rel (0) target = $region25
  $region24: #{tpu_custom_call.1} parent=0 // pred_region
    _
  $region25: #{tpu_custom_call.1} parent=0 // pred_fallthru
    _
  // Predicated region
  $region26: #{tpu_custom_call.1} parent=0 // pred_check
    _
  $region27: #{tpu_custom_call.1} parent=0 // pred_check_branch
    %966 = sbr.rel (0) target = $region29
  $region28: #{tpu_custom_call.1} parent=0 // pred_region
    _
  $region29: #{tpu_custom_call.1} parent=0 // pred_fallthru
    _

</llo_original>
